<compile_context>
chip_gen: v6e
topology: v6e:2x2x1
jax: 0.10.0
libtpu: 0.0.40
codegen_flags: <defaults>
</compile_context>

<pallas_src>
import functools

import numpy as np
import jax
import jax.numpy as jnp
from jax import lax
from jax.experimental import pallas as pl
from jax.experimental.pallas import tpu as pltpu


def _round_up(x, m):
    return ((x + m - 1) // m) * m


# ----------------------------- Pallas kernel ------------------------------

def _adj_mask_kernel(tok_ref, rhs_ref, out_ref, *, inner_cols,
                     inner_logit, cross_logit):
    """Fused inner+cross adjacency keep-mask.

    tok_ref: (T_pad, D)      prompt tokens (zero padded rows)
    rhs_ref: (C_pad, D)      concat([tokens, all graph nodes]) (zero padded)
    out_ref: (T_pad, C_pad)  uint8 keep mask; columns [0, inner_cols) use the
                             inner threshold, the rest use the cross one.
    """
    tok = tok_ref[...]                                        # (T_pad, D)
    rhs = rhs_ref[...]                                        # (C_pad, D)
    # td,nd->tn : contract last dims directly on the MXU (no RHS transpose).
    dot = lax.dot_general(
        tok, rhs,
        dimension_numbers=(((1,), (1,)), ((), ())),
        preferred_element_type=jnp.float32)                   # (T_pad, C_pad)
    col = lax.broadcasted_iota(jnp.int32, dot.shape, 1)
    thr = jnp.where(col < inner_cols,
                    jnp.float32(inner_logit), jnp.float32(cross_logit))
    # sigmoid(dot) >= prune  <=>  dot >= logit(prune)   (sigmoid monotonic, >0)
    out_ref[...] = (dot >= thr).astype(jnp.uint8)


def fused_adjacency_mask(tokens, graph_x, inner_prune, cross_prune):
    """Returns a (T_pad, C_pad) uint8 mask; valid region is [:T, :T+B*N].

    Columns [0, T) hold the inner (token-token) adjacency mask, columns
    [T + i*N, T + (i+1)*N) hold the cross (token-node) mask for graph i.
    """
    T, D = tokens.shape
    B, N, _ = graph_x.shape
    C = T + B * N
    T_pad = _round_up(max(T, 1), 32)     # uint8 sublane tile
    C_pad = _round_up(max(C, 1), 128)    # lane-dense output

    rhs = jnp.concatenate([tokens, graph_x.reshape(B * N, D)], axis=0)
    rhs_p = jnp.pad(rhs, ((0, C_pad - C), (0, 0)))
    tok_p = jnp.pad(tokens, ((0, T_pad - T), (0, 0)))

    inner_logit = float(np.log(inner_prune / (1.0 - inner_prune)))
    cross_logit = float(np.log(cross_prune / (1.0 - cross_prune)))

    kernel = functools.partial(
        _adj_mask_kernel,
        inner_cols=T, inner_logit=inner_logit, cross_logit=cross_logit)

    return pl.pallas_call(
        kernel,
        out_shape=jax.ShapeDtypeStruct((T_pad, C_pad), jnp.uint8),
        in_specs=[pl.BlockSpec(memory_space=pltpu.MemorySpace.VMEM),
                  pl.BlockSpec(memory_space=pltpu.MemorySpace.VMEM)],
        out_specs=pl.BlockSpec(memory_space=pltpu.MemorySpace.VMEM),
    )(tok_p, rhs_p)


# ------------------------- device-side fused step --------------------------

@functools.partial(jax.jit, static_argnames=("inner_prune", "cross_prune"))
def _device_forward(tokens, graph_x, inner_prune, cross_prune):
    """One dispatch: build prompted node features and the keep-mask on device."""
    T, D = tokens.shape
    B, N, _ = graph_x.shape
    mask = fused_adjacency_mask(tokens, graph_x, inner_prune, cross_prune)
    # prompted node features: [tokens ; graph_i nodes] for each graph
    x = jnp.concatenate(
        [jnp.broadcast_to(tokens[None, :, :], (B, T, D)), graph_x],
        axis=1).reshape(B * (T + N), D)
    return x, mask[:T, :T + B * N]        # only the valid slice leaves VMEM/HBM


# ----------------------------- parameter init -----------------------------

def kaiming_uniform(key, shape, a=0.01):
    # torch.nn.init.kaiming_uniform_(nonlinearity='leaky_relu', mode='fan_in')
    fan_in = shape[1]
    gain = np.sqrt(2.0 / (1.0 + a * a))
    bound = gain * np.sqrt(3.0 / fan_in)
    return jax.random.uniform(key, shape, jnp.float32, -bound, bound)


# ------------------------------ forward pass -------------------------------

def heavy_prompt_forward(tokens, graph_x, graph_edge_index,
                         inner_prune=0.3, cross_prune=0.1):
    """
    tokens:           [T, D]      prompt tokens (the learned parameter)
    graph_x:          [B, N, D]   node features of each input graph
    graph_edge_index: [B, 2, E]   edge index of each input graph (int)
    Returns (x, edge_index, batch) exactly like the PyTorch module:
      x          [B*(T+N), D]      (device array)
      edge_index [2, total_edges]  (int64, host)
      batch      [B*(T+N)]         (int64, host)
    """
    T, D = tokens.shape
    B, N, _ = graph_x.shape
    nodes_per_graph = T + N

    x, mask = _device_forward(tokens, graph_x, float(inner_prune),
                              float(cross_prune))

    # TODO(synk): nonzero() yields dynamically shaped edge lists; this
    # extraction + PyG Batch bookkeeping stays on host (no static-shape Pallas
    # equivalent). Only the tiny (T, T+B*N) uint8 mask is transferred.
    mask_np = np.asarray(mask)
    gei_np = np.asarray(graph_edge_index).astype(np.int64)

    inner_r, inner_c = np.nonzero(mask_np[:, :T])
    inner_edge = np.stack([inner_r, inner_c], axis=0).astype(np.int64)

    edge_list = []
    for i in range(B):
        # original graph edges shifted past the prompt tokens
        g_edge = gei_np[i] + T                                         # (2, E)
        # cross edges: row = token idx, col = node idx + T
        cr, cc = np.nonzero(mask_np[:, T + i * N: T + (i + 1) * N])
        cross_edge = np.stack([cr, cc + T], axis=0).astype(np.int64)   # (2, Ec)
        offset = i * nodes_per_graph  # Batch.from_data_list node offset
        edge_list.append(
            np.concatenate([inner_edge, g_edge, cross_edge], axis=1) + offset)

    edge_index = np.concatenate(edge_list, axis=1)
    batch = np.repeat(np.arange(B, dtype=np.int64), nodes_per_graph)
    return x, edge_index, batch


# ---------------------------------- main -----------------------------------

if __name__ == "__main__":
    token_dim = 32
    token_num = 10          # T
    num_graphs = 2          # B
    nodes_per_g = 16        # N
    inner_prune = 0.3
    cross_prune = 0.1

    key = jax.random.PRNGKey(0)
    k_tok, k_x = jax.random.split(key)

    # HeavyPrompt.__init__: one token group of shape (token_num, token_dim),
    # kaiming-uniform initialized.
    tokens = kaiming_uniform(k_tok, (token_num, token_dim), a=0.01)

    # synthetic graph batch: B graphs, each N nodes with D-dim features and a
    # directed ring of N edges.
    graph_x = jax.random.normal(k_x, (num_graphs, nodes_per_g, token_dim),
                                dtype=jnp.float32)
    src = np.arange(nodes_per_g)
    dst = (src + 1) % nodes_per_g
    ring = np.stack([src, dst], axis=0)                       # (2, N)
    graph_edge_index = jnp.asarray(
        np.broadcast_to(ring, (num_graphs, 2, nodes_per_g)).copy(),
        dtype=jnp.int32)

    x, edge_index, batch = heavy_prompt_forward(
        tokens, graph_x, graph_edge_index,
        inner_prune=inner_prune, cross_prune=cross_prune)
    jax.block_until_ready(x)

    # ---- sanity: shapes ----
    T, D, B, N = token_num, token_dim, num_graphs, nodes_per_g
    assert x.shape == (B * (T + N), D)
    assert edge_index.shape[0] == 2
    assert batch.shape == (B * (T + N),)

    # ---- sanity: kernel mask matches a numpy reference (boundary-tolerant) ----
    _, mask_dev = _device_forward(tokens, graph_x, inner_prune, cross_prune)
    mask_dev = np.asarray(mask_dev).astype(bool)
    tok_np = np.asarray(tokens, dtype=np.float32)
    rhs_np = np.concatenate(
        [tok_np, np.asarray(graph_x, dtype=np.float32).reshape(B * N, D)], 0)
    dots = tok_np @ rhs_np.T                                   # (T, T+B*N)
    thr = np.where(np.arange(T + B * N) < T,
                   np.log(inner_prune / (1.0 - inner_prune)),
                   np.log(cross_prune / (1.0 - cross_prune))).astype(np.float32)
    ref_mask = dots >= thr[None, :]
    diff = ref_mask != mask_dev
    # only tolerate disagreements that sit on the numerical threshold boundary
    assert (not diff.any()) or np.all(
        np.abs(dots[diff] - np.broadcast_to(thr, dots.shape)[diff]) < 1e-3)

    print("KERNEL_OK")
</pallas_src>

<mosaic_0001>
module attributes {stable_mosaic.version = 11 : i64} {
  func.func @_adj_mask_kernel(%arg0: memref<32x32xf32, #tpu.memory_space<vmem>>, %arg1: memref<128x32xf32, #tpu.memory_space<vmem>>, %arg2: memref<32x128xi8, #tpu.memory_space<vmem>>) attributes {dimension_semantics = [], scalar_prefetch = 0 : i64, scratch_operands = 0 : i64, tpu.core_type = #tpu.core_type<tc>} {
    %c0 = arith.constant 0 : index
    %c0_0 = arith.constant 0 : index
    %0 = vector.load %arg0[%c0, %c0_0] : memref<32x32xf32, #tpu.memory_space<vmem>>, vector<32x32xf32>
    %c0_1 = arith.constant 0 : index
    %c0_2 = arith.constant 0 : index
    %1 = vector.load %arg1[%c0_1, %c0_2] : memref<128x32xf32, #tpu.memory_space<vmem>>, vector<128x32xf32>
    %cst = arith.constant dense<0.000000e+00> : vector<32x128xf32>
    %2 = tpu.matmul %0, %1, %cst {dimension_numbers = #tpu.dot_dimension_numbers<[1], [1], [0], [0], [0, 0, 1, 0], [], []>} : vector<32x32xf32>, vector<128x32xf32>, vector<32x128xf32> -> vector<32x128xf32>
    %3 = tpu.iota {dimensions = array<i32: 1>} : vector<32x128xi32>
    %c10_i32 = arith.constant 10 : i32
    %4 = vector.broadcast %c10_i32 : i32 to vector<32x128xi32>
    %5 = arith.cmpi slt, %3, %4 : vector<32x128xi32>
    %cst_3 = arith.constant -0.847297847 : f32
    %cst_4 = arith.constant -2.19722462 : f32
    %6 = vector.broadcast %cst_3 : f32 to vector<32x128xf32>
    %7 = vector.broadcast %cst_4 : f32 to vector<32x128xf32>
    %8 = arith.select %5, %6, %7 : vector<32x128xi1>, vector<32x128xf32>
    %9 = arith.cmpf oge, %2, %8 : vector<32x128xf32>
    %10 = arith.extui %9 : vector<32x128xi1> to vector<32x128xi8>
    %c0_5 = arith.constant 0 : index
    %c0_6 = arith.constant 0 : index
    %11 = vector.load %arg2[%c0_5, %c0_6] : memref<32x128xi8, #tpu.memory_space<vmem>>, vector<32x128xi8>
    tpu.vector_store %arg2[%c0_5, %c0_6], %10 {strides = array<i32>} : memref<32x128xi8, #tpu.memory_space<vmem>>, vector<32x128xi8>,
    return
  }
}

</mosaic_0001>

<llo_original>
// kernel: _device_forward.1
$region0: #{_device_forward.1}
  #allocation0 [shape = 'u32[]', space=smem, size = 0x4, offset = 0x4, fixed_abs, tag = 'smem constant byte address 0x4 - core index']
  #allocation1 [shape = 'u32[144,128]{1,0:T(1,128)}', space=vmem, size = 0x12000, scoped, tag = 'internal scratch']
  %s0 = inlined_call_operand.vmem [shape: f32[32,32], index: 0, kind: input, shape index: {}]
  %s1 = inlined_call_operand.vmem [shape: f32[128,32], index: 1, kind: input, shape index: {}]
  %s2 = inlined_call_operand.vmem [shape: u8[32,128], index: 2, kind: output, shape index: {}]
  %s3 = sld [smem:[#allocation0]]
  $region18: #{_device_forward.1} parent=0
    _
  %s5 = ssub.s32 1, %s3
  %s6 = scalar_select 0, %s5, %s3
  // Predicated region
  $region2: #{_device_forward.1} parent=0 // pred_check
    _
  $region3: #{_device_forward.1} parent=0 // pred_check_branch
    %8 = sbr.rel (0) target = $region5
  $region4: #{_device_forward.1} parent=0 // pred_region
    _
  $region5: #{_device_forward.1} parent=0 // pred_fallthru
    _
  // Predicated region
  $region6: #{_device_forward.1} parent=0 // pred_check
    _
  $region7: #{_device_forward.1} parent=0 // pred_check_branch
    %10 = sbr.rel (0) target = $region9
  $region8: #{_device_forward.1} parent=0 // pred_region
    _
  $region9: #{_device_forward.1} parent=0 // pred_fallthru
    _
  %v13 = vld [vmem:[%s0] sm:$0xff]
  %v14 = vld [vmem:[%s0 + $0x8] sm:$0xff]
  %v15 = vld [vmem:[%s0 + $0x10] sm:$0xff]
  %v16 = vld [vmem:[%s0 + $0x18] sm:$0xff]
  %v17 = vld [vmem:[%s1] sm:$0xff]
  %v18 = vld [vmem:[%s1 + $0x8] sm:$0xff]
  %v19 = vld [vmem:[%s1 + $0x10] sm:$0xff]
  %v20 = vld [vmem:[%s1 + $0x18] sm:$0xff]
  %v21 = vld [vmem:[%s1 + $0x20] sm:$0xff]
  %v22 = vld [vmem:[%s1 + $0x28] sm:$0xff]
  %v23 = vld [vmem:[%s1 + $0x30] sm:$0xff]
  %v24 = vld [vmem:[%s1 + $0x38] sm:$0xff]
  %v25 = vld [vmem:[%s1 + $0x40] sm:$0xff]
  %v26 = vld [vmem:[%s1 + $0x48] sm:$0xff]
  %v27 = vld [vmem:[%s1 + $0x50] sm:$0xff]
  %v28 = vld [vmem:[%s1 + $0x58] sm:$0xff]
  %v29 = vld [vmem:[%s1 + $0x60] sm:$0xff]
  %v30 = vld [vmem:[%s1 + $0x68] sm:$0xff]
  %v31 = vld [vmem:[%s1 + $0x70] sm:$0xff]
  %v32 = vld [vmem:[%s1 + $0x78] sm:$0xff]
  %vm33 = vcmask 261120
  %v35 = vsel %vm33, %v13, 0
  %v38 = vsel %vm33, %v14, 0
  %v41 = vsel %vm33, %v15, 0
  %v44 = vsel %vm33, %v16, 0
  %v47 = vsel %vm33, %v17, 0
  %v50 = vsel %vm33, %v18, 0
  %v53 = vsel %vm33, %v19, 0
  %v56 = vsel %vm33, %v20, 0
  %v59 = vsel %vm33, %v21, 0
  %v62 = vsel %vm33, %v22, 0
  %v65 = vsel %vm33, %v23, 0
  %v68 = vsel %vm33, %v24, 0
  %v71 = vsel %vm33, %v25, 0
  %v74 = vsel %vm33, %v26, 0
  %v77 = vsel %vm33, %v27, 0
  %v80 = vsel %vm33, %v28, 0
  %v83 = vsel %vm33, %v29, 0
  %v86 = vsel %vm33, %v30, 0
  %v89 = vsel %vm33, %v31, 0
  %v92 = vsel %vm33, %v32, 0
  %94 = vmatprep.subr.mxu0 0.0
  %95 = vmatpush1.xpose.msra.mxu0 %v92
  %96 = vmatprep.subr.mxu0 0.0
  %97 = vmatpush1.xpose.msra.mxu0 %v89
  %98 = vmatprep.subr.mxu0 0.0
  %99 = vmatpush1.xpose.msra.mxu0 %v86
  %100 = vmatprep.subr.mxu0 0.0
  %101 = vmatpush1.xpose.msra.mxu0 %v83
  %102 = vmatprep.subr.mxu0 0.0
  %103 = vmatpush1.xpose.msra.mxu0 %v80
  %104 = vmatprep.subr.mxu0 0.0
  %105 = vmatpush1.xpose.msra.mxu0 %v77
  %106 = vmatprep.subr.mxu0 0.0
  %107 = vmatpush1.xpose.msra.mxu0 %v74
  %108 = vmatprep.subr.mxu0 0.0
  %109 = vmatpush1.xpose.msra.mxu0 %v71
  %110 = vmatprep.subr.mxu0 0.0
  %111 = vmatpush1.xpose.msra.mxu0 %v68
  %112 = vmatprep.subr.mxu0 0.0
  %113 = vmatpush1.xpose.msra.mxu0 %v65
  %114 = vmatprep.subr.mxu0 0.0
  %115 = vmatpush1.xpose.msra.mxu0 %v62
  %116 = vmatprep.subr.mxu0 0.0
  %117 = vmatpush1.xpose.msra.mxu0 %v59
  %118 = vmatprep.subr.mxu0 0.0
  %119 = vmatpush1.xpose.msra.mxu0 %v56
  %120 = vmatprep.subr.mxu0 0.0
  %121 = vmatpush1.xpose.msra.mxu0 %v53
  %122 = vmatprep.subr.mxu0 0.0
  %123 = vmatpush1.xpose.msra.mxu0 %v50
  %124 = vmatprep.subr.mxu0 0.0
  %125 = vmatpush1.xpose.msra.mxu0 %v47
  %126 = vmatprep.subr.mxu0 0.0
  %127 = vmatpush2.xpose.msra.mxu0 0.0
  %128 = vmatprep.subr.mxu0 0.0
  %129 = vmatpush2.xpose.msra.mxu0 0.0
  %130 = vmatprep.subr.mxu0 0.0
  %131 = vmatpush2.xpose.msra.mxu0 0.0
  %132 = vmatprep.subr.mxu0 0.0
  %133 = vmatpush2.xpose.msra.mxu0 0.0
  %134 = vmatprep.subr.mxu0 0.0
  %135 = vmatpush2.xpose.msra.mxu0 0.0
  %136 = vmatprep.subr.mxu0 0.0
  %137 = vmatpush2.xpose.msra.mxu0 0.0
  %138 = vmatprep.subr.mxu0 0.0
  %139 = vmatpush2.xpose.msra.mxu0 0.0
  %140 = vmatprep.subr.mxu0 0.0
  %141 = vmatpush2.xpose.msra.mxu0 0.0
  %142 = vmatprep.subr.mxu0 0.0
  %143 = vmatpush2.xpose.msra.mxu0 0.0
  %144 = vmatprep.subr.mxu0 0.0
  %145 = vmatpush2.xpose.msra.mxu0 0.0
  %146 = vmatprep.subr.mxu0 0.0
  %147 = vmatpush2.xpose.msra.mxu0 0.0
  %148 = vmatprep.subr.mxu0 0.0
  %149 = vmatpush2.xpose.msra.mxu0 0.0
  %150 = vmatprep.subr.mxu0 0.0
  %151 = vmatpush2.xpose.msra.mxu0 0.0
  %152 = vmatprep.subr.mxu0 0.0
  %153 = vmatpush2.xpose.msra.mxu0 0.0
  %154 = vmatprep.subr.mxu0 0.0
  %155 = vmatpush2.xpose.msra.mxu0 0.0
  %156 = vmatprep.subr.mxu0 0.0
  %157 = vmatpush2.xpose.msra.mxu0 0.0
  %158 = vmatprep.mubr.f32.mxu0 0.0
  %159 = vmatmul.mubr.f32.gmra.mxu0 %v35
  %v160 = vpop.f32.mrf.mxu0
  %v161 = vadd.f32 0.0, %v160
  %v162 = vpop.f32.mrf.mxu0
  %163 = vmatprep.mubr.f32.mxu0 0.0
  %164 = vmatmul.mubr.f32.gmra.mxu0 %v38
  %v165 = vpop.f32.mrf.mxu0
  %v166 = vadd.f32 0.0, %v165
  %v167 = vpop.f32.mrf.mxu0
  %168 = vmatprep.mubr.f32.mxu0 0.0
  %169 = vmatmul.mubr.f32.gmra.mxu0 %v41
  %v170 = vpop.f32.mrf.mxu0
  %v171 = vadd.f32 0.0, %v170
  %v172 = vpop.f32.mrf.mxu0
  %173 = vmatprep.mubr.f32.mxu0 0.0
  %174 = vmatmul.mubr.f32.gmra.mxu0 %v44
  %v175 = vpop.f32.mrf.mxu0
  %v176 = vadd.f32 0.0, %v175
  %v177 = vpop.f32.mrf.mxu0
  %178 = vdwg.mxu0
  %v179 = vlaneseq
  %v180 = vand.u32 %v179, 127
  %vm181 = vcmp.lt.s32.totalorder %v180, 10
  %v182 = vsel %vm181, -0.84729785, -2.1972246
  %vm183 = vcmp.ge.f32.partialorder %v161, %v182
  %vm184 = vcmp.ge.f32.partialorder %v166, %v182
  %vm185 = vcmp.ge.f32.partialorder %v171, %v182
  %vm186 = vcmp.ge.f32.partialorder %v176, %v182
  %vm187 = vmpackc.low %vm184, %vm183
  %vm188 = vmpackc.low %vm186, %vm185
  %vm189 = vmpackc.even %vm188, %vm187
  %v190 = vsel %vm189, 16843009, 0
  %v191 = vunpack.c.0.s8 %v190
  %v192 = vunpack.c.1.s8 %v190
  %v193 = vunpack.c.2.s8 %v190
  %v194 = vunpack.c.3.s8 %v190
  %v195 = vpack.c.b16 %v191, %v191
  %v196 = vpack.c.b8 %v195, %v195
  %v197 = vpack.c.b16 %v192, %v192
  %v198 = vpack.c.b8 %v197, %v197
  %v199 = vpack.c.b16 %v193, %v193
  %v200 = vpack.c.b8 %v199, %v199
  %v201 = vpack.c.b16 %v194, %v194
  %v202 = vpack.c.b8 %v201, %v201
  %203 = vst [vmem:[%s2] sm:$0x3] %v196
  %204 = vst [vmem:[%s2 + $0x2] sm:$0x3] %v198
  %205 = vst [vmem:[%s2 + $0x4] sm:$0x3] %v200
  %206 = vst [vmem:[%s2 + $0x6] sm:$0x3] %v202
  // Predicated region
  $region10: #{_device_forward.1} parent=0 // pred_check
    _
  $region11: #{_device_forward.1} parent=0 // pred_check_branch
    %208 = sbr.rel (0) target = $region13
  $region12: #{_device_forward.1} parent=0 // pred_region
    _
  $region13: #{_device_forward.1} parent=0 // pred_fallthru
    _
  // Predicated region
  $region14: #{_device_forward.1} parent=0 // pred_check
    _
  $region15: #{_device_forward.1} parent=0 // pred_check_branch
    %210 = sbr.rel (0) target = $region17
  $region16: #{_device_forward.1} parent=0 // pred_region
    _
  $region17: #{_device_forward.1} parent=0 // pred_fallthru
    _

</llo_original>
